<compile_context>
chip_gen: v6e
topology: v6e:2x2x1
jax: 0.10.0
libtpu: 0.0.40
codegen_flags: <defaults>
</compile_context>

<pallas_src>
import functools

import jax
import jax.numpy as jnp
from jax.experimental import pallas as pl
from jax.experimental.pallas import tpu as pltpu


# Explicit scoped-VMEM cap (defaults are 16/32 MiB; v7x physical is 64 MiB and
# every tile below is sized far under it).
_VMEM_LIMIT = 64 * 1024 * 1024


def _cparams(dims):
    return pltpu.CompilerParams(dimension_semantics=dims,
                                vmem_limit_bytes=_VMEM_LIMIT)


# -------------------------------------------------------------------------
# tiling helper
# -------------------------------------------------------------------------
def _pick_tile(dim, target, align):
    """Largest tile <= target that divides `dim` and is a multiple of `align`.
    Falls back to the full dim (always a legal TPU block size)."""
    if dim <= target:
        return dim
    t = (target // align) * align
    while t >= align:
        if dim % t == 0:
            return t
        t -= align
    return dim


# -------------------------------------------------------------------------
# Tiled linear (+ optional fused bias/ReLU) kernel
# -------------------------------------------------------------------------
def _matmul_kernel(x_ref, w_ref, b_ref, o_ref, acc_ref, *, activation):
    @pl.when(pl.program_id(2) == 0)
    def _():
        acc_ref[...] = jnp.zeros_like(acc_ref)

    acc_ref[...] += jnp.dot(x_ref[...], w_ref[...],
                            preferred_element_type=jnp.float32)

    @pl.when(pl.program_id(2) == pl.num_programs(2) - 1)
    def _():
        y = acc_ref[...] + b_ref[...]
        if activation == "relu":
            y = jnp.maximum(y, 0.0)
        o_ref[...] = y.astype(o_ref.dtype)


def linear(x, w, b, *, activation="none", tm=256, tn=256, tk=512):
    # x: (M, K), w: (K, N) (pre-transposed to (in, out)), b: (N,)
    M, K = x.shape
    N = w.shape[1]
    tm = _pick_tile(M, tm, 8)
    tn = _pick_tile(N, tn, 128)
    tk = _pick_tile(K, tk, 128)
    grid = (M // tm, N // tn, K // tk)
    return pl.pallas_call(
        functools.partial(_matmul_kernel, activation=activation),
        grid=grid,
        in_specs=[
            pl.BlockSpec((tm, tk), lambda i, j, k: (i, k)),
            pl.BlockSpec((tk, tn), lambda i, j, k: (k, j)),
            pl.BlockSpec((1, tn), lambda i, j, k: (0, j)),
        ],
        out_specs=pl.BlockSpec((tm, tn), lambda i, j, k: (i, j)),
        out_shape=jax.ShapeDtypeStruct((M, N), x.dtype),
        scratch_shapes=[pltpu.VMEM((tm, tn), jnp.float32)],
        compiler_params=_cparams(("parallel", "parallel", "arbitrary")),
    )(x, w, b.reshape(1, N))


# -------------------------------------------------------------------------
# Tiled linear with residual-add + LayerNorm fused into the last-K epilogue
# (used for sa_out / ca_out / lin2:  out = LN(x @ W + b + residual))
# -------------------------------------------------------------------------
def _linear_addln_kernel(x_ref, w_ref, b_ref, res_ref, g_ref, bb_ref, o_ref,
                         acc_ref, *, eps):
    @pl.when(pl.program_id(1) == 0)
    def _():
        acc_ref[...] = jnp.zeros_like(acc_ref)

    acc_ref[...] += jnp.dot(x_ref[...], w_ref[...],
                            preferred_element_type=jnp.float32)

    @pl.when(pl.program_id(1) == pl.num_programs(1) - 1)
    def _():
        y = acc_ref[...] + b_ref[...] + res_ref[...].astype(jnp.float32)
        mu = jnp.mean(y, axis=-1, keepdims=True)
        var = jnp.mean(jnp.square(y - mu), axis=-1, keepdims=True)
        o_ref[...] = ((y - mu) * jax.lax.rsqrt(var + eps) * g_ref[...]
                      + bb_ref[...]).astype(o_ref.dtype)


def linear_add_layernorm(x, w, b, residual, gamma, beta, *, eps=1e-5,
                         tm=256, tk=256):
    M, K = x.shape
    D = w.shape[1]
    tm = _pick_tile(M, tm, 8)
    tk = _pick_tile(K, tk, 128)
    grid = (M // tm, K // tk)
    return pl.pallas_call(
        functools.partial(_linear_addln_kernel, eps=eps),
        grid=grid,
        in_specs=[
            pl.BlockSpec((tm, tk), lambda i, k: (i, k)),
            pl.BlockSpec((tk, D), lambda i, k: (k, 0)),
            pl.BlockSpec((1, D), lambda i, k: (0, 0)),
            pl.BlockSpec((tm, D), lambda i, k: (i, 0)),
            pl.BlockSpec((1, D), lambda i, k: (0, 0)),
            pl.BlockSpec((1, D), lambda i, k: (0, 0)),
        ],
        out_specs=pl.BlockSpec((tm, D), lambda i, k: (i, 0)),
        out_shape=jax.ShapeDtypeStruct((M, D), residual.dtype),
        scratch_shapes=[pltpu.VMEM((tm, D), jnp.float32)],
        compiler_params=_cparams(("parallel", "arbitrary")),
    )(x, w, b.reshape(1, D), residual, gamma.reshape(1, D), beta.reshape(1, D))


# -------------------------------------------------------------------------
# Standalone LayerNorm (final norm)
# -------------------------------------------------------------------------
def _layernorm_kernel(x_ref, g_ref, b_ref, o_ref, *, eps):
    x = x_ref[...].astype(jnp.float32)
    mu = jnp.mean(x, axis=-1, keepdims=True)
    var = jnp.mean(jnp.square(x - mu), axis=-1, keepdims=True)
    o_ref[...] = ((x - mu) * jax.lax.rsqrt(var + eps) * g_ref[...]
                  + b_ref[...]).astype(o_ref.dtype)


def layernorm(x, gamma, beta, eps=1e-5, tm=256):
    M, D = x.shape
    tm = _pick_tile(M, tm, 8)
    return pl.pallas_call(
        functools.partial(_layernorm_kernel, eps=eps),
        grid=(M // tm,),
        in_specs=[pl.BlockSpec((tm, D), lambda i: (i, 0)),
                  pl.BlockSpec((1, D), lambda i: (0, 0)),
                  pl.BlockSpec((1, D), lambda i: (0, 0))],
        out_specs=pl.BlockSpec((tm, D), lambda i: (i, 0)),
        out_shape=jax.ShapeDtypeStruct((M, D), x.dtype),
        compiler_params=_cparams(("parallel",)),
    )(x, gamma.reshape(1, D), beta.reshape(1, D))


# -------------------------------------------------------------------------
# Flash attention: grid=(B, H, Sq/tq, Sk/tk), online softmax over the Sk axis.
# bias is either None, a (1, Sq, Sk) shared additive mask, or a (B, 1, Sk)
# per-batch key-padding bias.  1/sqrt(Dh) is folded into the Q projection.
# -------------------------------------------------------------------------
def _flash_attn_kernel(q_ref, k_ref, v_ref, *rest, has_bias):
    if has_bias:
        b_ref, o_ref, m_sc, l_sc, acc_sc = rest
    else:
        o_ref, m_sc, l_sc, acc_sc = rest
        b_ref = None

    ki = pl.program_id(3)

    @pl.when(ki == 0)
    def _():
        m_sc[...] = jnp.full_like(m_sc, -jnp.inf)
        l_sc[...] = jnp.zeros_like(l_sc)
        acc_sc[...] = jnp.zeros_like(acc_sc)

    q = q_ref[0, 0]                           # (tq, Dh)
    k = k_ref[0, 0]                           # (tk, Dh)
    v = v_ref[0, 0]                           # (tk, Dh)
    s = jax.lax.dot_general(q, k, (((1,), (1,)), ((), ())),
                            preferred_element_type=jnp.float32)   # (tq, tk)
    if b_ref is not None:
        s = s + b_ref[0]                      # (tq,tk) or (1,tk) broadcast

    m_prev = m_sc[...]
    m_new = jnp.maximum(m_prev, jnp.max(s, axis=-1, keepdims=True))
    alpha = jnp.exp(m_prev - m_new)
    p = jnp.exp(s - m_new)
    l_sc[...] = alpha * l_sc[...] + jnp.sum(p, axis=-1, keepdims=True)
    acc_sc[...] = alpha * acc_sc[...] + jnp.dot(
        p.astype(v.dtype), v, preferred_element_type=jnp.float32)
    m_sc[...] = m_new

    @pl.when(ki == pl.num_programs(3) - 1)
    def _():
        inv = pl.reciprocal(l_sc[...], approx=True)
        o_ref[0, 0] = (acc_sc[...] * inv).astype(o_ref.dtype)


def flash_attention(q, k, v, bias=None, *, tq=256, tk=256):
    # q: (B, H, Sq, Dh), k/v: (B, H, Sk, Dh)
    B, H, Sq, Dh = q.shape
    Sk = k.shape[2]
    tq = _pick_tile(Sq, tq, 8)
    tk = _pick_tile(Sk, tk, 128)   # last dim of the bias block -> keep 128-aligned
    grid = (B, H, Sq // tq, Sk // tk)

    in_specs = [
        pl.BlockSpec((1, 1, tq, Dh), lambda b, h, qi, ki: (b, h, qi, 0)),
        pl.BlockSpec((1, 1, tk, Dh), lambda b, h, qi, ki: (b, h, ki, 0)),
        pl.BlockSpec((1, 1, tk, Dh), lambda b, h, qi, ki: (b, h, ki, 0)),
    ]
    args = [q, k, v]
    has_bias = bias is not None
    if has_bias:
        if bias.shape[1] == 1:   # (B, 1, Sk) key-padding bias
            in_specs.append(pl.BlockSpec((1, 1, tk),
                                         lambda b, h, qi, ki: (b, 0, ki)))
        else:                    # (1, Sq, Sk) shared additive mask
            in_specs.append(pl.BlockSpec((1, tq, tk),
                                         lambda b, h, qi, ki: (0, qi, ki)))
        args.append(bias)

    return pl.pallas_call(
        functools.partial(_flash_attn_kernel, has_bias=has_bias),
        grid=grid,
        in_specs=in_specs,
        out_specs=pl.BlockSpec((1, 1, tq, Dh), lambda b, h, qi, ki: (b, h, qi, 0)),
        out_shape=jax.ShapeDtypeStruct((B, H, Sq, Dh), q.dtype),
        scratch_shapes=[pltpu.VMEM((tq, 1), jnp.float32),
                        pltpu.VMEM((tq, 1), jnp.float32),
                        pltpu.VMEM((tq, Dh), jnp.float32)],
        compiler_params=_cparams(("parallel", "parallel", "parallel", "arbitrary")),
    )(*args)


def _split_heads(x2d, B, S, H, Dh):
    # (B*S, H*Dh) -> (B, H, S, Dh); plain XLA transpose, cheap vs. attention.
    return x2d.reshape(B, S, H, Dh).transpose(0, 2, 1, 3)


def _merge_heads(x4d):
    # (B, H, S, Dh) -> (B*S, H*Dh)
    B, H, S, Dh = x4d.shape
    return x4d.transpose(0, 2, 1, 3).reshape(B * S, H * Dh)


# -------------------------------------------------------------------------
# fc_out + softmax, vocab-tiled.
#   Kernel 1: streams the vocab axis; emits logits tiles + per-row logsumexp
#             via running max/sum scratch (bounded VMEM, no (tm,V) acc).
#   Kernel 2: exact normalization probs = exp(logits - lse).
# -------------------------------------------------------------------------
def _fc_logits_lse_kernel(x_ref, w_ref, b_ref, logits_ref, lse_ref,
                          acc_ref, m_sc, l_sc):
    j = pl.program_id(1)
    k = pl.program_id(2)

    @pl.when(k == 0)
    def _():
        acc_ref[...] = jnp.zeros_like(acc_ref)

    acc_ref[...] += jnp.dot(x_ref[...], w_ref[...],
                            preferred_element_type=jnp.float32)

    @pl.when(k == pl.num_programs(2) - 1)
    def _():
        @pl.when(j == 0)
        def _():
            m_sc[...] = jnp.full_like(m_sc, -jnp.inf)
            l_sc[...] = jnp.zeros_like(l_sc)

        logits = acc_ref[...] + b_ref[...]
        logits_ref[...] = logits
        m_prev = m_sc[...]
        m_new = jnp.maximum(m_prev, jnp.max(logits, axis=-1, keepdims=True))
        l_sc[...] = (l_sc[...] * jnp.exp(m_prev - m_new)
                     + jnp.sum(jnp.exp(logits - m_new), axis=-1, keepdims=True))
        m_sc[...] = m_new

        @pl.when(j == pl.num_programs(1) - 1)
        def _():
            lse_ref[...] = m_sc[...] + jnp.log(l_sc[...])


def _softmax_norm_kernel(logits_ref, lse_ref, o_ref):
    o_ref[...] = jnp.exp(logits_ref[...] - lse_ref[...]).astype(o_ref.dtype)


def fc_softmax(x, w, b, *, tm=256, tn=512, tk=512):
    M, K = x.shape
    V = w.shape[1]
    tm = _pick_tile(M, tm, 8)
    tn = _pick_tile(V, tn, 128)
    tk = _pick_tile(K, tk, 128)

    logits, lse = pl.pallas_call(
        _fc_logits_lse_kernel,
        grid=(M // tm, V // tn, K // tk),
        in_specs=[
            pl.BlockSpec((tm, tk), lambda i, j, k: (i, k)),
            pl.BlockSpec((tk, tn), lambda i, j, k: (k, j)),
            pl.BlockSpec((1, tn), lambda i, j, k: (0, j)),
        ],
        out_specs=[
            pl.BlockSpec((tm, tn), lambda i, j, k: (i, j)),
            pl.BlockSpec((tm, 1), lambda i, j, k: (i, 0)),
        ],
        out_shape=[
            jax.ShapeDtypeStruct((M, V), jnp.float32),   # logits kept f32 for exact softmax
            jax.ShapeDtypeStruct((M, 1), jnp.float32),
        ],
        scratch_shapes=[pltpu.VMEM((tm, tn), jnp.float32),
                        pltpu.VMEM((tm, 1), jnp.float32),
                        pltpu.VMEM((tm, 1), jnp.float32)],
        compiler_params=_cparams(("parallel", "arbitrary", "arbitrary")),
    )(x, w, b.reshape(1, V))

    return pl.pallas_call(
        _softmax_norm_kernel,
        grid=(M // tm, V // tn),
        in_specs=[
            pl.BlockSpec((tm, tn), lambda i, j: (i, j)),
            pl.BlockSpec((tm, 1), lambda i, j: (i, 0)),
        ],
        out_specs=pl.BlockSpec((tm, tn), lambda i, j: (i, j)),
        out_shape=jax.ShapeDtypeStruct((M, V), x.dtype),
        compiler_params=_cparams(("parallel", "parallel")),
    )(logits, lse)


# -------------------------------------------------------------------------
# Model glue (plain JAX): residual structure, per-layer wiring
# -------------------------------------------------------------------------
def decoder_layer(x, memory, p, num_heads, self_bias, cross_bias):
    # nn.TransformerDecoderLayer, norm_first=False (post-norm), relu FFN,
    # dropout = identity (eval semantics).
    B, S, D = x.shape
    Sk = memory.shape[1]
    H = num_heads
    Dh = D // H
    xf = x.reshape(B * S, D)
    mf = memory.reshape(B * Sk, D)

    # --- self attention (fused QKV projection; 1/sqrt(Dh) folded into Q) ---
    qkv = linear(xf, p["sa_qkv_w"], p["sa_qkv_b"])               # (B*S, 3D)
    q = _split_heads(qkv[:, :D], B, S, H, Dh)
    k = _split_heads(qkv[:, D:2 * D], B, S, H, Dh)
    v = _split_heads(qkv[:, 2 * D:], B, S, H, Dh)
    sa = _merge_heads(flash_attention(q, k, v, self_bias))        # (B*S, D)
    xf = linear_add_layernorm(sa, p["sa_out_w"], p["sa_out_b"], xf,
                              p["norm1_g"], p["norm1_b"])

    # --- cross attention (Q from tgt; fused KV projection of memory) ---
    qc = _split_heads(linear(xf, p["ca_q_w"], p["ca_q_b"]), B, S, H, Dh)
    kvm = linear(mf, p["ca_kv_w"], p["ca_kv_b"])                  # (B*Sk, 2D)
    kc = _split_heads(kvm[:, :D], B, Sk, H, Dh)
    vc = _split_heads(kvm[:, D:], B, Sk, H, Dh)
    ca = _merge_heads(flash_attention(qc, kc, vc, cross_bias))    # (B*S, D)
    xf = linear_add_layernorm(ca, p["ca_out_w"], p["ca_out_b"], xf,
                              p["norm2_g"], p["norm2_b"])

    # --- FFN (ReLU fused into first matmul; residual+LN fused into second) ---
    h = linear(xf, p["lin1_w"], p["lin1_b"], activation="relu")
    xf = linear_add_layernorm(h, p["lin2_w"], p["lin2_b"], xf,
                              p["norm3_g"], p["norm3_b"])
    return xf.reshape(B, S, D)


def transformer_decoder_forward(params, tgt, memory, num_heads,
                                tgt_mask=None, memory_mask=None):
    B, S = tgt.shape
    D = params["embedding"].shape[1]

    # TODO(synk): embedding gather + positional add stay in plain XLA (no clean
    # Pallas win for a small token gather).
    x = jnp.take(params["embedding"], tgt, axis=0)                # (B, S, D)
    x = x + params["pos_emb"][:S][None, :, :].astype(x.dtype)

    # attention biases (additive f32), built once and shared across layers/heads
    if tgt_mask is None:
        self_bias = None
    else:
        tb = jnp.where(tgt_mask, -1e9, 0.0) if tgt_mask.dtype == jnp.bool_ else tgt_mask
        self_bias = tb.astype(jnp.float32).reshape(1, S, S)       # shared over B & H
    if memory_mask is None:
        cross_bias = None
    else:
        # NOTE: the reference module forwards memory_mask as memory_key_padding_mask,
        # i.e. a (B, Sk) boolean key-padding mask. We keep those semantics.
        kp = jnp.where(memory_mask, -1e9, 0.0).astype(jnp.float32)
        cross_bias = kp[:, None, :]                               # (B, 1, Sk)

    for p in params["layers"]:
        x = decoder_layer(x, memory.astype(x.dtype), p, num_heads,
                          self_bias, cross_bias)

    xf = layernorm(x.reshape(B * S, D), params["norm_g"], params["norm_b"])
    probs = fc_softmax(xf, params["fc_w"], params["fc_b"])
    return probs.reshape(B, S, -1)


# -------------------------------------------------------------------------
# Parameters: torch-layout init + one-time conversion to kernel layout
# -------------------------------------------------------------------------
def init_params(key, embed_dim, num_heads, dense_dim, vocab_size, num_layers,
                max_seq_len):
    """Parameters in PyTorch layout (linear weights are (out, in))."""
    def nrm(k, shape, scale=0.02):
        return (scale * jax.random.normal(k, shape)).astype(jnp.float32)

    keys = jax.random.split(key, 4 + num_layers)
    params = {
        "embedding": nrm(keys[0], (vocab_size, embed_dim), 1.0),
        "pos_emb": jnp.zeros((max_seq_len, embed_dim), jnp.float32),  # torch init: zeros
        "fc_w": nrm(keys[2], (vocab_size, embed_dim)),
        "fc_b": jnp.zeros((vocab_size,), jnp.float32),
        "norm_g": jnp.ones((embed_dim,), jnp.float32),
        "norm_b": jnp.zeros((embed_dim,), jnp.float32),
        "layers": [],
    }
    for li in range(num_layers):
        lk = jax.random.split(keys[4 + li], 8)
        params["layers"].append({
            "self_in_proj_w": nrm(lk[0], (3 * embed_dim, embed_dim)),
            "self_in_proj_b": jnp.zeros((3 * embed_dim,), jnp.float32),
            "self_out_proj_w": nrm(lk[1], (embed_dim, embed_dim)),
            "self_out_proj_b": jnp.zeros((embed_dim,), jnp.float32),
            "cross_in_proj_w": nrm(lk[2], (3 * embed_dim, embed_dim)),
            "cross_in_proj_b": jnp.zeros((3 * embed_dim,), jnp.float32),
            "cross_out_proj_w": nrm(lk[3], (embed_dim, embed_dim)),
            "cross_out_proj_b": jnp.zeros((embed_dim,), jnp.float32),
            "lin1_w": nrm(lk[4], (dense_dim, embed_dim)),
            "lin1_b": jnp.zeros((dense_dim,), jnp.float32),
            "lin2_w": nrm(lk[5], (embed_dim, dense_dim)),
            "lin2_b": jnp.zeros((embed_dim,), jnp.float32),
            "norm1_g": jnp.ones((embed_dim,), jnp.float32),
            "norm1_b": jnp.zeros((embed_dim,), jnp.float32),
            "norm2_g": jnp.ones((embed_dim,), jnp.float32),
            "norm2_b": jnp.zeros((embed_dim,), jnp.float32),
            "norm3_g": jnp.ones((embed_dim,), jnp.float32),
            "norm3_b": jnp.zeros((embed_dim,), jnp.float32),
        })
    return params


def prepare_params(raw, embed_dim, num_heads, dtype=jnp.float32):
    """One-time conversion to kernel layout: weights pre-transposed to (in, out),
    Q/K/V fused, 1/sqrt(Dh) folded into the Q projection, optional bf16 cast for
    the matmul data path (LayerNorm params & biases stay f32)."""
    D = embed_dim
    scale = 1.0 / ((D // num_heads) ** 0.5)
    c = lambda a: a.astype(dtype)
    out = {
        "embedding": c(raw["embedding"]),
        "pos_emb": raw["pos_emb"],
        "fc_w": c(raw["fc_w"].T),                   # (D, vocab)
        "fc_b": raw["fc_b"],
        "norm_g": raw["norm_g"],
        "norm_b": raw["norm_b"],
        "layers": [],
    }
    for l in raw["layers"]:
        w, b = l["self_in_proj_w"], l["self_in_proj_b"]
        sa_qkv_w = jnp.concatenate(
            [w[:D].T * scale, w[D:2 * D].T, w[2 * D:].T], axis=1)        # (D, 3D)
        sa_qkv_b = jnp.concatenate([b[:D] * scale, b[D:]], axis=0)       # (3D,)
        w, b = l["cross_in_proj_w"], l["cross_in_proj_b"]
        ca_q_w = w[:D].T * scale                                          # (D, D)
        ca_q_b = b[:D] * scale
        ca_kv_w = jnp.concatenate([w[D:2 * D].T, w[2 * D:].T], axis=1)    # (D, 2D)
        ca_kv_b = b[D:]
        out["layers"].append({
            "sa_qkv_w": c(sa_qkv_w), "sa_qkv_b": sa_qkv_b,
            "sa_out_w": c(l["self_out_proj_w"].T), "sa_out_b": l["self_out_proj_b"],
            "ca_q_w": c(ca_q_w), "ca_q_b": ca_q_b,
            "ca_kv_w": c(ca_kv_w), "ca_kv_b": ca_kv_b,
            "ca_out_w": c(l["cross_out_proj_w"].T), "ca_out_b": l["cross_out_proj_b"],
            "lin1_w": c(l["lin1_w"].T), "lin1_b": l["lin1_b"],
            "lin2_w": c(l["lin2_w"].T), "lin2_b": l["lin2_b"],
            "norm1_g": l["norm1_g"], "norm1_b": l["norm1_b"],
            "norm2_g": l["norm2_g"], "norm2_b": l["norm2_b"],
            "norm3_g": l["norm3_g"], "norm3_b": l["norm3_b"],
        })
    return out


if __name__ == "__main__":
    # small config consistent with the module
    embed_dim, num_heads, dense_dim = 32, 4, 64
    vocab_size, num_layers, max_seq_len = 64, 2, 16
    B, S, S_mem = 2, 8, 8

    key = jax.random.PRNGKey(0)
    kp, kt, km = jax.random.split(key, 3)
    raw_params = init_params(kp, embed_dim, num_heads, dense_dim, vocab_size,
                             num_layers, max_seq_len)
    params = prepare_params(raw_params, embed_dim, num_heads)   # f32 demo

    tgt = jax.random.randint(kt, (B, S), 0, vocab_size, dtype=jnp.int32)
    memory = jax.random.normal(km, (B, S_mem, embed_dim), dtype=jnp.float32)

    # causal additive tgt_mask (float), as typically passed to nn.TransformerDecoderLayer
    causal = jnp.where(
        jnp.arange(S)[:, None] >= jnp.arange(S)[None, :], 0.0, -1e9
    ).astype(jnp.float32)

    out = transformer_decoder_forward(params, tgt, memory, num_heads,
                                      tgt_mask=causal, memory_mask=None)
    out = jax.block_until_ready(out)

    assert out.shape == (B, S, vocab_size)
    # exact logsumexp normalization -> rows sum to 1 within fp32 tolerance
    assert bool(jnp.allclose(jnp.sum(out, axis=-1), 1.0, atol=1e-4))
    print("KERNEL_OK")
</pallas_src>

<mosaic_0001>
module attributes {stable_mosaic.version = 11 : i64} {
  func.func @_matmul_kernel(%arg0: i32, %arg1: i32, %arg2: i32, %arg3: memref<16x32xf32, #tpu.memory_space<vmem>>, %arg4: memref<32x96xf32, #tpu.memory_space<vmem>>, %arg5: memref<1x96xf32, #tpu.memory_space<vmem>>, %arg6: memref<16x96xf32, #tpu.memory_space<vmem>>, %arg7: memref<16x96xf32, #tpu.memory_space<vmem>>) attributes {dimension_semantics = [#tpu.dimension_semantics<parallel>, #tpu.dimension_semantics<parallel>, #tpu.dimension_semantics<arbitrary>], iteration_bounds = array<i64: 1, 1, 1>, scalar_prefetch = 0 : i64, scratch_operands = 1 : i64, tpu.core_type = #tpu.core_type<tc>, window_params = [{transform_indices = @transform_0, window_bounds = array<i64: 16, 32>}, {transform_indices = @transform_1, window_bounds = array<i64: 32, 96>}, {transform_indices = @transform_2, window_bounds = array<i64: 1, 96>}, {transform_indices = @transform_3, window_bounds = array<i64: 16, 96>}]} {
    %c0_i32 = arith.constant 0 : i32
    %0 = arith.cmpi eq, %arg2, %c0_i32 : i32
    %1 = arith.extui %0 : i1 to i32
    %c0_i32_0 = arith.constant 0 : i32
    %2 = arith.cmpi ne, %1, %c0_i32_0 : i32
    scf.if %2 {
      %cst_10 = arith.constant 0.000000e+00 : f32
      %12 = vector.broadcast %cst_10 : f32 to vector<16x96xf32>
      %c0_11 = arith.constant 0 : index
      %c0_12 = arith.constant 0 : index
      %13 = vector.load %arg7[%c0_11, %c0_12] : memref<16x96xf32, #tpu.memory_space<vmem>>, vector<16x96xf32>
      tpu.vector_store %arg7[%c0_11, %c0_12], %12 {strides = array<i32>} : memref<16x96xf32, #tpu.memory_space<vmem>>, vector<16x96xf32>,
    } else {
    }
    %c0 = arith.constant 0 : index
    %c0_1 = arith.constant 0 : index
    %3 = vector.load %arg7[%c0, %c0_1] : memref<16x96xf32, #tpu.memory_space<vmem>>, vector<16x96xf32>
    %c0_2 = arith.constant 0 : index
    %c0_3 = arith.constant 0 : index
    %4 = vector.load %arg3[%c0_2, %c0_3] : memref<16x32xf32, #tpu.memory_space<vmem>>, vector<16x32xf32>
    %c0_4 = arith.constant 0 : index
    %c0_5 = arith.constant 0 : index
    %5 = vector.load %arg4[%c0_4, %c0_5] : memref<32x96xf32, #tpu.memory_space<vmem>>, vector<32x96xf32>
    %cst = arith.constant dense<0.000000e+00> : vector<16x96xf32>
    %6 = tpu.matmul %4, %5, %cst {dimension_numbers = #tpu.dot_dimension_numbers<[1], [0], [0], [1], [0, 0, 1, 1], [], []>} : vector<16x32xf32>, vector<32x96xf32>, vector<16x96xf32> -> vector<16x96xf32>
    %7 = arith.addf %3, %6 : vector<16x96xf32>
    %c0_6 = arith.constant 0 : index
    %c0_7 = arith.constant 0 : index
    %8 = vector.load %arg7[%c0_6, %c0_7] : memref<16x96xf32, #tpu.memory_space<vmem>>, vector<16x96xf32>
    tpu.vector_store %arg7[%c0_6, %c0_7], %7 {strides = array<i32>} : memref<16x96xf32, #tpu.memory_space<vmem>>, vector<16x96xf32>,
    %c0_i32_8 = arith.constant 0 : i32
    %9 = arith.cmpi eq, %arg2, %c0_i32_8 : i32
    %10 = arith.extui %9 : i1 to i32
    %c0_i32_9 = arith.constant 0 : i32
    %11 = arith.cmpi ne, %10, %c0_i32_9 : i32
    scf.if %11 {
      %c0_10 = arith.constant 0 : index
      %c0_11 = arith.constant 0 : index
      %12 = vector.load %arg7[%c0_10, %c0_11] : memref<16x96xf32, #tpu.memory_space<vmem>>, vector<16x96xf32>
      %c0_12 = arith.constant 0 : index
      %c0_13 = arith.constant 0 : index
      %13 = vector.load %arg5[%c0_12, %c0_13] : memref<1x96xf32, #tpu.memory_space<vmem>>, vector<1x96xf32>
      %14 = vector.broadcast %13 : vector<1x96xf32> to vector<16x96xf32>
      %15 = arith.addf %12, %14 : vector<16x96xf32>
      %c0_14 = arith.constant 0 : index
      %c0_15 = arith.constant 0 : index
      %16 = vector.load %arg6[%c0_14, %c0_15] : memref<16x96xf32, #tpu.memory_space<vmem>>, vector<16x96xf32>
      tpu.vector_store %arg6[%c0_14, %c0_15], %15 {strides = array<i32>} : memref<16x96xf32, #tpu.memory_space<vmem>>, vector<16x96xf32>,
    } else {
    }
    return
  }
  func.func @transform_0(%arg0: i32, %arg1: i32, %arg2: i32) -> (i32, i32) {
    %c0_i32 = arith.constant 0 : i32
    return %arg0, %arg2 : i32, i32
  }
  func.func @transform_1(%arg0: i32, %arg1: i32, %arg2: i32) -> (i32, i32) {
    %c0_i32 = arith.constant 0 : i32
    return %arg2, %arg1 : i32, i32
  }
  func.func @transform_2(%arg0: i32, %arg1: i32, %arg2: i32) -> (i32, i32) {
    %c0_i32 = arith.constant 0 : i32
    %c0_i32_0 = arith.constant 0 : i32
    return %c0_i32, %arg1 : i32, i32
  }
  func.func @transform_3(%arg0: i32, %arg1: i32, %arg2: i32) -> (i32, i32) {
    %c0_i32 = arith.constant 0 : i32
    return %arg0, %arg1 : i32, i32
  }
}

</mosaic_0001>

<llo_original>
// kernel: tpu_custom_call.1
$region0: #{tpu_custom_call.1}
  #allocation0 [shape = 'u32[]', space=smem, size = 0x4, offset = 0x4, fixed_abs, tag = 'smem constant byte address 0x4 - core index']
  #allocation1 [shape = 'u32[144,128]{1,0:T(1,128)}', space=vmem, size = 0x12000, scoped, tag = 'internal scratch']
  #allocation2 [shape = 'f32[16,96]{1,0:T(8,128)}', space=vmem, size = 0x2000, scoped, tag = 'scratch operand']
  %s0 = inlined_call_operand.hbm [shape: f32[16,32], index: 0, kind: input, shape index: {}]
  %s1 = inlined_call_operand.hbm [shape: f32[32,96], index: 1, kind: input, shape index: {}]
  %s2 = inlined_call_operand.vmem [shape: f32[1,96], index: 2, kind: input, shape index: {}]
  %s3 = inlined_call_operand.hbm [shape: f32[16,96], index: 3, kind: output, shape index: {}]
  %s4 = sld [smem:[#allocation0]]
  $region38: #{tpu_custom_call.1} parent=0
    _
  %s6 = ssub.s32 1, %s4
  %s7 = scalar_select 0, %s6, %s4
  $region1: #{tpu_custom_call.1} parent=0
    #allocation3 [shape = 'u8[8192]{0}', space=vmem, size = 0x2000, scoped, tag = 'input window, operand 0, single buffered']
    #allocation4 [shape = 's32[1]{0}', space=sflag, size = 0x4, scoped, tag = 'scoped memory for tpu_custom_call.1']
    #allocation5 [shape = 's32[1]{0}', space=sflag, size = 0x4, scoped, tag = 'scoped memory for tpu_custom_call.1']
    #allocation6 [shape = 'u8[16384]{0}', space=vmem, size = 0x4000, scoped, tag = 'input window, operand 1, single buffered']
    #allocation7 [shape = 's32[1]{0}', space=sflag, size = 0x4, scoped, tag = 'scoped memory for tpu_custom_call.1']
    #allocation8 [shape = 'u8[8192]{0}', space=vmem, size = 0x2000, scoped, tag = 'output window, operand 0, single buffered']
    %8 = vsyncpa [#allocation4], 0
    %9 = vsyncpa [#allocation7], 0
    %10 = vsyncpa [#allocation5], 0
    // Predicated region
    $region2: #{tpu_custom_call.1} parent=1 // pred_check
      _
    $region3: #{tpu_custom_call.1} parent=1 // pred_check_branch
      %12 = sbr.rel (0) target = $region5
    $region4: #{tpu_custom_call.1} parent=1 // pred_region
      %s14 = ssub.s32 256, 256
      %15 = vsyncadd [#allocation4], %s14
      %s16 = sshll.u32 [#allocation3], 4
      %s17 = int_to_ptr.vmem [resolvable:$true] %s16
      %22 = dma.hbm_to_vmem [thread:$0]  %s0, 256, %s17, [#allocation4], 128, 128, 8
    $region5: #{tpu_custom_call.1} parent=1 // pred_fallthru
      _
    // Predicated region
    $region6: #{tpu_custom_call.1} parent=1 // pred_check
      _
    $region7: #{tpu_custom_call.1} parent=1 // pred_check_branch
      %24 = sbr.rel (0) target = $region9
    $region8: #{tpu_custom_call.1} parent=1 // pred_region
      %s26 = ssub.s32 512, 512
      %27 = vsyncadd [#allocation7], %s26
      %s28 = sshll.u32 [#allocation6], 4
      %s29 = int_to_ptr.vmem [resolvable:$true] %s28
      %34 = dma.hbm_to_vmem [thread:$0]  %s1, 512, %s29, [#allocation7], 128, 128, 8
    $region9: #{tpu_custom_call.1} parent=1 // pred_fallthru
      _
    // Predicated region
    $region10: #{tpu_custom_call.1} parent=1 // pred_check
      _
    $region11: #{tpu_custom_call.1} parent=1 // pred_check_branch
      %36 = sbr.rel (0) target = $region13
    $region12: #{tpu_custom_call.1} parent=1 // pred_region
      _
    $region13: #{tpu_custom_call.1} parent=1 // pred_fallthru
      _
    // Predicated region
    $region14: #{tpu_custom_call.1} parent=1 // pred_check
      _
    $region15: #{tpu_custom_call.1} parent=1 // pred_check_branch
      %38 = sbr.rel (0) target = $region17
    $region16: #{tpu_custom_call.1} parent=1 // pred_region
      %39 = dma.done [#allocation4], 256
    $region17: #{tpu_custom_call.1} parent=1 // pred_fallthru
      _
    // Predicated region
    $region18: #{tpu_custom_call.1} parent=1 // pred_check
      _
    $region19: #{tpu_custom_call.1} parent=1 // pred_check_branch
      %41 = sbr.rel (0) target = $region21
    $region20: #{tpu_custom_call.1} parent=1 // pred_region
      %42 = dma.done [#allocation7], 512
    $region21: #{tpu_custom_call.1} parent=1 // pred_fallthru
      _
    %p43 = scmp.eq.s32.totalorder 0, 0
    // Predicated region
    $region22: #{tpu_custom_call.1} parent=1 // pred_check
      %p44 = pneg %p43
    $region23: #{tpu_custom_call.1} parent=1 // pred_check_branch
      %46 = sbr.rel (%p44) target = $region25
    $region24: #{tpu_custom_call.1} parent=1 // pred_region
      %vm47 = vcmask 785408
      %48 = vst.msk [vmem:[#allocation2] sm:$0xff] %vm47, 0.0
      %49 = vst.msk [vmem:[#allocation2 + $0x8] sm:$0xff] %vm47, 0.0
    $region25: #{tpu_custom_call.1} parent=1 // pred_fallthru
      _
    %v50 = vld [vmem:[#allocation2] sm:$0xff]
    %v51 = vld [vmem:[#allocation2 + $0x8] sm:$0xff]
    %v52 = vld [vmem:[#allocation3] sm:$0xff]
    %v53 = vld [vmem:[#allocation3 + $0x8] sm:$0xff]
    %v54 = vld [vmem:[#allocation6] sm:$0xff]
    %v55 = vld [vmem:[#allocation6 + $0x8] sm:$0xff]
    %v56 = vld [vmem:[#allocation6 + $0x10] sm:$0xff]
    %v57 = vld [vmem:[#allocation6 + $0x18] sm:$0xff]
    %vm58 = vcmask 261120
    %v60 = vsel %vm58, %v52, 0
    %v63 = vsel %vm58, %v53, 0
    %65 = vmatprep.subr.mxu0 0.0
    %66 = vmatpush1.msra.mxu0 0.0
    %67 = vmatprep.subr.mxu0 0.0
    %68 = vmatpush1.msra.mxu0 0.0
    %69 = vmatprep.subr.mxu0 0.0
    %70 = vmatpush1.msra.mxu0 0.0
    %71 = vmatprep.subr.mxu0 0.0
    %72 = vmatpush1.msra.mxu0 0.0
    %73 = vmatprep.subr.mxu0 0.0
    %74 = vmatpush1.msra.mxu0 0.0
    %75 = vmatprep.subr.mxu0 0.0
    %76 = vmatpush1.msra.mxu0 0.0
    %77 = vmatprep.subr.mxu0 0.0
    %78 = vmatpush1.msra.mxu0 0.0
    %79 = vmatprep.subr.mxu0 0.0
    %80 = vmatpush1.msra.mxu0 0.0
    %81 = vmatprep.subr.mxu0 0.0
    %82 = vmatpush1.msra.mxu0 0.0
    %83 = vmatprep.subr.mxu0 0.0
    %84 = vmatpush1.msra.mxu0 0.0
    %85 = vmatprep.subr.mxu0 0.0
    %86 = vmatpush1.msra.mxu0 0.0
    %87 = vmatprep.subr.mxu0 0.0
    %88 = vmatpush1.msra.mxu0 0.0
    %89 = vmatprep.subr.mxu0 0.0
    %90 = vmatpush1.msra.mxu0 %v57
    %91 = vmatprep.subr.mxu0 0.0
    %92 = vmatpush1.msra.mxu0 %v56
    %93 = vmatprep.subr.mxu0 0.0
    %94 = vmatpush1.msra.mxu0 %v55
    %95 = vmatprep.subr.mxu0 0.0
    %96 = vmatpush1.msra.mxu0 %v54
    %97 = vmatprep.subr.mxu0 0.0
    %98 = vmatpush2.msra.mxu0 0.0
    %99 = vmatprep.subr.mxu0 0.0
    %100 = vmatpush2.msra.mxu0 0.0
    %101 = vmatprep.subr.mxu0 0.0
    %102 = vmatpush2.msra.mxu0 0.0
    %103 = vmatprep.subr.mxu0 0.0
    %104 = vmatpush2.msra.mxu0 0.0
    %105 = vmatprep.subr.mxu0 0.0
    %106 = vmatpush2.msra.mxu0 0.0
    %107 = vmatprep.subr.mxu0 0.0
    %108 = vmatpush2.msra.mxu0 0.0
    %109 = vmatprep.subr.mxu0 0.0
    %110 = vmatpush2.msra.mxu0 0.0
    %111 = vmatprep.subr.mxu0 0.0
    %112 = vmatpush2.msra.mxu0 0.0
    %113 = vmatprep.subr.mxu0 0.0
    %114 = vmatpush2.msra.mxu0 0.0
    %115 = vmatprep.subr.mxu0 0.0
    %116 = vmatpush2.msra.mxu0 0.0
    %117 = vmatprep.subr.mxu0 0.0
    %118 = vmatpush2.msra.mxu0 0.0
    %119 = vmatprep.subr.mxu0 0.0
    %120 = vmatpush2.msra.mxu0 0.0
    %121 = vmatprep.subr.mxu0 0.0
    %122 = vmatpush2.msra.mxu0 0.0
    %123 = vmatprep.subr.mxu0 0.0
    %124 = vmatpush2.msra.mxu0 0.0
    %125 = vmatprep.subr.mxu0 0.0
    %126 = vmatpush2.msra.mxu0 0.0
    %127 = vmatprep.subr.mxu0 0.0
    %128 = vmatpush2.msra.mxu0 0.0
    %129 = vmatprep.mubr.f32.mxu0 0.0
    %130 = vmatmul.mubr.f32.gmra.mxu0 %v60
    %v131 = vpop.f32.mrf.mxu0
    %v132 = vadd.f32 0.0, %v131
    %v133 = vpop.f32.mrf.mxu0
    %134 = vmatprep.mubr.f32.mxu0 0.0
    %135 = vmatmul.mubr.f32.gmra.mxu0 %v63
    %v136 = vpop.f32.mrf.mxu0
    %v137 = vadd.f32 0.0, %v136
    %v138 = vpop.f32.mrf.mxu0
    %139 = vdwg.mxu0
    %v140 = vadd.f32 %v50, %v132
    %v141 = vadd.f32 %v51, %v137
    %vm142 = vcmask 785408
    %143 = vst.msk [vmem:[#allocation2] sm:$0xff] %vm142, %v140
    %144 = vst.msk [vmem:[#allocation2 + $0x8] sm:$0xff] %vm142, %v141
    // Predicated region
    $region26: #{tpu_custom_call.1} parent=1 // pred_check
      %p145 = pneg %p43
    $region27: #{tpu_custom_call.1} parent=1 // pred_check_branch
      %147 = sbr.rel (%p145) target = $region29
    $region28: #{tpu_custom_call.1} parent=1 // pred_region
      %v148 = vld [vmem:[#allocation2] sm:$0xff]
      %v149 = vld [vmem:[#allocation2 + $0x8] sm:$0xff]
      %v150 = vld [vmem:[%s2] sm:$0x1]
      %v152 = vlaneseq
      %v153 = vshrl.u32 %v152, 7
      %v154 = vsub.s32 0, %v153
      %v155 = vrot.slane %v150, %v154
      %v157 = vadd.f32 %v148, %v155
      %v158 = vadd.f32 %v149, %v155
      %159 = vst.msk [vmem:[#allocation8] sm:$0xff] %vm142, %v157
      %160 = vst.msk [vmem:[#allocation8 + $0x8] sm:$0xff] %vm142, %v158
    $region29: #{tpu_custom_call.1} parent=1 // pred_fallthru
      _
    // Predicated region
    $region30: #{tpu_custom_call.1} parent=1 // pred_check
      _
    $region31: #{tpu_custom_call.1} parent=1 // pred_check_branch
      %162 = sbr.rel (0) target = $region33
    $region32: #{tpu_custom_call.1} parent=1 // pred_region
      %s164 = ssub.s32 256, 256
      %165 = vsyncadd [#allocation5], %s164
      %s166 = sshll.u32 [#allocation8], 4
      %s167 = int_to_ptr.vmem [resolvable:$true] %s166
      %172 = dma.vmem_to_hbm [thread:$0]  %s167, 256, %s3, [#allocation5], 128, 128, 8
    $region33: #{tpu_custom_call.1} parent=1 // pred_fallthru
      _
    // Predicated region
    $region34: #{tpu_custom_call.1} parent=1 // pred_check
      _
    $region35: #{tpu_custom_call.1} parent=1 // pred_check_branch
      %174 = sbr.rel (0) target = $region37
    $region36: #{tpu_custom_call.1} parent=1 // pred_region
      %175 = dma.done [#allocation5], 256
    $region37: #{tpu_custom_call.1} parent=1 // pred_fallthru
      _
    %176 = vsyncpa [#allocation4], 1
    %177 = vsyncpa [#allocation7], 1
    %178 = vsyncpa [#allocation5], 1

</llo_original>
